<compile_context>
chip_gen: v7x
topology: tpu7x:2x2x1
jax: 0.10.0
libtpu: 0.0.40
codegen_flags: <defaults>
</compile_context>

<pallas_src>
import jax
import jax.numpy as jnp
from jax.experimental import pallas as pl
from jax.experimental.pallas import tpu as pltpu

C_IN = 3
C_OUT = 8


def _fused_conv_kernel(w5_ref, w6_ref, b5_ref, b6_ref, x1_ref, x2_ref, o_ref):
    # w5_ref, w6_ref : (C_OUT, C_IN)
    # b5_ref, b6_ref : (C_OUT, 1)
    # x1_ref, x2_ref : (1, C_IN, H, W)      one batch element per grid step
    # o_ref          : (1, C_OUT, H+2, W+2) full padded output block
    _, _, H, W = x1_ref.shape

    w5 = w5_ref[...]                                   # (C_OUT, C_IN)
    w6 = w6_ref[...]
    bias4 = (b5_ref[...] + b6_ref[...])[None, :, :, None]   # (1, C_OUT, 1, 1)

    # padding=1 border of a 1x1 conv is bias-only -> one full VMEM init store.
    o_ref[...] = jnp.broadcast_to(jnp.clip(bias4, 0.2, 0.8), o_ref.shape)

    # Hoist per-channel weight broadcasts out of the row loop.
    w5c = [w5[:, c:c + 1][None, :, :, None] for c in range(C_IN)]  # (1,C_OUT,1,1)
    w6c = [w6[:, c:c + 1][None, :, :, None] for c in range(C_IN)]

    # Interior: unrolled VPU broadcast-FMAs over the 3 input channels,
    # processed in 8-row chunks to keep the live accumulator small.
    TR = 8
    for r0 in range(0, H, TR):
        tr = min(TR, H - r0)
        x1c = x1_ref[:, :, r0:r0 + tr, :]              # (1, C_IN, tr, W)
        x2c = x2_ref[:, :, r0:r0 + tr, :]
        acc = w5c[0] * x1c[:, 0:1, :, :] + w6c[0] * x2c[:, 0:1, :, :]
        for c in range(1, C_IN):
            acc = acc + w5c[c] * x1c[:, c:c + 1, :, :] \
                      + w6c[c] * x2c[:, c:c + 1, :, :]
        # hardtanh(y, 0.2, 0.8); store into the interior window of the
        # padded output block (VMEM-side store; HBM writeback happens once).
        o_ref[:, :, 1 + r0:1 + r0 + tr, 1:W + 1] = jnp.clip(acc + bias4, 0.2, 0.8)


def fused_model_forward(x1, x2, w5, b5, w6, b6):
    """x1, x2: (N, C_IN, H, W) float32.  Returns (N, C_OUT, H+2, W+2) NCHW."""
    N, C, H, W = x1.shape
    assert C == C_IN
    Hp, Wp = H + 2, W + 2

    # Free reshapes only -- no wrapper-side arithmetic / packing ops.
    w5m = w5.reshape(C_OUT, C_IN).astype(jnp.float32)
    w6m = w6.reshape(C_OUT, C_IN).astype(jnp.float32)
    b5m = b5.reshape(C_OUT, 1).astype(jnp.float32)
    b6m = b6.reshape(C_OUT, 1).astype(jnp.float32)

    return pl.pallas_call(
        _fused_conv_kernel,
        out_shape=jax.ShapeDtypeStruct((N, C_OUT, Hp, Wp), jnp.float32),
        grid=(N,),  # one batch element per step; "parallel" -> both TCs on v7x
        in_specs=[
            pl.BlockSpec((C_OUT, C_IN), lambda i: (0, 0)),
            pl.BlockSpec((C_OUT, C_IN), lambda i: (0, 0)),
            pl.BlockSpec((C_OUT, 1), lambda i: (0, 0)),
            pl.BlockSpec((C_OUT, 1), lambda i: (0, 0)),
            pl.BlockSpec((1, C_IN, H, W), lambda i: (i, 0, 0, 0)),
            pl.BlockSpec((1, C_IN, H, W), lambda i: (i, 0, 0, 0)),
        ],
        out_specs=pl.BlockSpec((1, C_OUT, Hp, Wp), lambda i: (i, 0, 0, 0)),
        compiler_params=pltpu.CompilerParams(
            dimension_semantics=("parallel",)),
    )(w5m, w6m, b5m, b6m, x1.astype(jnp.float32), x2.astype(jnp.float32))
    # TODO(synk): for very large H*W add a row-tiled grid axis; at the module's
    # sizes (64x64) the per-sample block (~0.5 MiB double-buffered) fits VMEM.


def reference_forward(x1, x2, w5, b5, w6, b6):
    """Plain-JAX reference of the returned value (for sanity check)."""
    def conv1x1_pad1(x, w, b):
        xp = jnp.pad(x, ((0, 0), (0, 0), (1, 1), (1, 1)))
        y = jnp.einsum('nchw,oc->nohw', xp, w.reshape(C_OUT, C_IN))
        return y + b.reshape(1, C_OUT, 1, 1)
    v8 = conv1x1_pad1(x1, w5, b5)
    v9 = conv1x1_pad1(x2, w6, b6)
    return jnp.clip(v8 + v9, 0.2, 0.8)


if __name__ == "__main__":
    key = jax.random.PRNGKey(0)
    k1, k2, k3, k4, k5, k6 = jax.random.split(key, 6)

    # small shapes consistent with the module (n=3, c=3), spatial shrunk to 16
    N, H, W = 3, 16, 16
    x1 = jax.random.normal(k1, (N, C_IN, H, W), dtype=jnp.float32)
    x2 = jax.random.normal(k2, (N, C_IN, H, W), dtype=jnp.float32)

    # deterministic init for conv5 / conv6 (the only params affecting the return)
    bound = 1.0 / (C_IN ** 0.5)
    w5 = jax.random.uniform(k3, (C_OUT, C_IN, 1, 1), jnp.float32, -bound, bound)
    b5 = jax.random.uniform(k4, (C_OUT,), jnp.float32, -bound, bound)
    w6 = jax.random.uniform(k5, (C_OUT, C_IN, 1, 1), jnp.float32, -bound, bound)
    b6 = jax.random.uniform(k6, (C_OUT,), jnp.float32, -bound, bound)

    fwd = jax.jit(fused_model_forward)
    out = jax.block_until_ready(fwd(x1, x2, w5, b5, w6, b6))

    ref = reference_forward(x1, x2, w5, b5, w6, b6)
    assert out.shape == (N, C_OUT, H + 2, W + 2), out.shape
    assert jnp.allclose(out, ref, atol=1e-5, rtol=1e-5)

    print("KERNEL_OK")
</pallas_src>

<mosaic_0001>
module attributes {stable_mosaic.version = 11 : i64} {
  func.func @_fused_conv_kernel(%arg0: i32, %arg1: memref<8x3xf32, #tpu.memory_space<vmem>>, %arg2: memref<8x3xf32, #tpu.memory_space<vmem>>, %arg3: memref<8x1xf32, #tpu.memory_space<vmem>>, %arg4: memref<8x1xf32, #tpu.memory_space<vmem>>, %arg5: memref<1x3x16x16xf32, #tpu.memory_space<vmem>>, %arg6: memref<1x3x16x16xf32, #tpu.memory_space<vmem>>, %arg7: memref<1x8x18x18xf32, #tpu.memory_space<vmem>>) attributes {dimension_semantics = [#tpu.dimension_semantics<parallel>], iteration_bounds = array<i64: 3>, scalar_prefetch = 0 : i64, scratch_operands = 0 : i64, tpu.core_type = #tpu.core_type<tc>, window_params = [{pipeline_mode = #tpu.pipeline_mode<synchronous>, transform_indices = @transform_0, window_bounds = array<i64: 8, 3>}, {pipeline_mode = #tpu.pipeline_mode<synchronous>, transform_indices = @transform_1, window_bounds = array<i64: 8, 3>}, {pipeline_mode = #tpu.pipeline_mode<synchronous>, transform_indices = @transform_2, window_bounds = array<i64: 8, 1>}, {pipeline_mode = #tpu.pipeline_mode<synchronous>, transform_indices = @transform_3, window_bounds = array<i64: 8, 1>}, {transform_indices = @transform_4, window_bounds = array<i64: 1, 3, 16, 16>}, {transform_indices = @transform_5, window_bounds = array<i64: 1, 3, 16, 16>}, {transform_indices = @transform_6, window_bounds = array<i64: 1, 8, 18, 18>}]} {
    %c0 = arith.constant 0 : index
    %c0_0 = arith.constant 0 : index
    %0 = vector.load %arg1[%c0, %c0_0] : memref<8x3xf32, #tpu.memory_space<vmem>>, vector<8x3xf32>
    %c0_1 = arith.constant 0 : index
    %c0_2 = arith.constant 0 : index
    %1 = vector.load %arg2[%c0_1, %c0_2] : memref<8x3xf32, #tpu.memory_space<vmem>>, vector<8x3xf32>
    %c0_3 = arith.constant 0 : index
    %c0_4 = arith.constant 0 : index
    %2 = vector.load %arg3[%c0_3, %c0_4] : memref<8x1xf32, #tpu.memory_space<vmem>>, vector<8x1xf32>
    %c0_5 = arith.constant 0 : index
    %c0_6 = arith.constant 0 : index
    %3 = vector.load %arg4[%c0_5, %c0_6] : memref<8x1xf32, #tpu.memory_space<vmem>>, vector<8x1xf32>
    %4 = arith.addf %2, %3 : vector<8x1xf32>
    %5 = vector.shape_cast %4 : vector<8x1xf32> to vector<1x8x1x1xf32>
    %cst = arith.constant 2.000000e-01 : f32
    %cst_7 = arith.constant 8.000000e-01 : f32
    %6 = vector.broadcast %cst : f32 to vector<1x8x1x1xf32>
    %7 = arith.maximumf %6, %5 : vector<1x8x1x1xf32>
    %8 = vector.broadcast %cst_7 : f32 to vector<1x8x1x1xf32>
    %9 = arith.minimumf %8, %7 : vector<1x8x1x1xf32>
    %10 = vector.shape_cast %9 : vector<1x8x1x1xf32> to vector<1x8x1x1xf32>
    %11 = vector.broadcast %10 : vector<1x8x1x1xf32> to vector<1x8x18x18xf32>
    %c0_8 = arith.constant 0 : index
    %c0_9 = arith.constant 0 : index
    %c0_10 = arith.constant 0 : index
    %c0_11 = arith.constant 0 : index
    %12 = vector.load %arg7[%c0_8, %c0_9, %c0_10, %c0_11] : memref<1x8x18x18xf32, #tpu.memory_space<vmem>>, vector<1x8x18x18xf32>
    tpu.vector_store %arg7[%c0_8, %c0_9, %c0_10, %c0_11], %11 {strides = array<i32>} : memref<1x8x18x18xf32, #tpu.memory_space<vmem>>, vector<1x8x18x18xf32>,
    %13 = vector.extract_strided_slice %0 {offsets = [0, 0], sizes = [8, 1], strides = [1, 1]} : vector<8x3xf32> to vector<8x1xf32>
    %14 = vector.shape_cast %13 : vector<8x1xf32> to vector<1x8x1x1xf32>
    %15 = vector.extract_strided_slice %0 {offsets = [0, 1], sizes = [8, 1], strides = [1, 1]} : vector<8x3xf32> to vector<8x1xf32>
    %16 = vector.shape_cast %15 : vector<8x1xf32> to vector<1x8x1x1xf32>
    %17 = vector.extract_strided_slice %0 {offsets = [0, 2], sizes = [8, 1], strides = [1, 1]} : vector<8x3xf32> to vector<8x1xf32>
    %18 = vector.shape_cast %17 : vector<8x1xf32> to vector<1x8x1x1xf32>
    %19 = vector.extract_strided_slice %1 {offsets = [0, 0], sizes = [8, 1], strides = [1, 1]} : vector<8x3xf32> to vector<8x1xf32>
    %20 = vector.shape_cast %19 : vector<8x1xf32> to vector<1x8x1x1xf32>
    %21 = vector.extract_strided_slice %1 {offsets = [0, 1], sizes = [8, 1], strides = [1, 1]} : vector<8x3xf32> to vector<8x1xf32>
    %22 = vector.shape_cast %21 : vector<8x1xf32> to vector<1x8x1x1xf32>
    %23 = vector.extract_strided_slice %1 {offsets = [0, 2], sizes = [8, 1], strides = [1, 1]} : vector<8x3xf32> to vector<8x1xf32>
    %24 = vector.shape_cast %23 : vector<8x1xf32> to vector<1x8x1x1xf32>
    %c0_12 = arith.constant 0 : index
    %c0_13 = arith.constant 0 : index
    %c0_14 = arith.constant 0 : index
    %c0_15 = arith.constant 0 : index
    %25 = vector.load %arg5[%c0_12, %c0_13, %c0_14, %c0_15] : memref<1x3x16x16xf32, #tpu.memory_space<vmem>>, vector<1x3x8x16xf32>
    %c0_16 = arith.constant 0 : index
    %c0_17 = arith.constant 0 : index
    %c0_18 = arith.constant 0 : index
    %c0_19 = arith.constant 0 : index
    %26 = vector.load %arg6[%c0_16, %c0_17, %c0_18, %c0_19] : memref<1x3x16x16xf32, #tpu.memory_space<vmem>>, vector<1x3x8x16xf32>
    %27 = vector.extract_strided_slice %25 {offsets = [0, 0, 0, 0], sizes = [1, 1, 8, 16], strides = [1, 1, 1, 1]} : vector<1x3x8x16xf32> to vector<1x1x8x16xf32>
    %28 = vector.broadcast %14 : vector<1x8x1x1xf32> to vector<1x8x8x16xf32>
    %29 = vector.broadcast %27 : vector<1x1x8x16xf32> to vector<1x8x8x16xf32>
    %30 = arith.mulf %28, %29 : vector<1x8x8x16xf32>
    %31 = vector.extract_strided_slice %26 {offsets = [0, 0, 0, 0], sizes = [1, 1, 8, 16], strides = [1, 1, 1, 1]} : vector<1x3x8x16xf32> to vector<1x1x8x16xf32>
    %32 = vector.broadcast %20 : vector<1x8x1x1xf32> to vector<1x8x8x16xf32>
    %33 = vector.broadcast %31 : vector<1x1x8x16xf32> to vector<1x8x8x16xf32>
    %34 = arith.mulf %32, %33 : vector<1x8x8x16xf32>
    %35 = arith.addf %30, %34 : vector<1x8x8x16xf32>
    %36 = vector.extract_strided_slice %25 {offsets = [0, 1, 0, 0], sizes = [1, 1, 8, 16], strides = [1, 1, 1, 1]} : vector<1x3x8x16xf32> to vector<1x1x8x16xf32>
    %37 = vector.broadcast %16 : vector<1x8x1x1xf32> to vector<1x8x8x16xf32>
    %38 = vector.broadcast %36 : vector<1x1x8x16xf32> to vector<1x8x8x16xf32>
    %39 = arith.mulf %37, %38 : vector<1x8x8x16xf32>
    %40 = arith.addf %35, %39 : vector<1x8x8x16xf32>
    %41 = vector.extract_strided_slice %26 {offsets = [0, 1, 0, 0], sizes = [1, 1, 8, 16], strides = [1, 1, 1, 1]} : vector<1x3x8x16xf32> to vector<1x1x8x16xf32>
    %42 = vector.broadcast %22 : vector<1x8x1x1xf32> to vector<1x8x8x16xf32>
    %43 = vector.broadcast %41 : vector<1x1x8x16xf32> to vector<1x8x8x16xf32>
    %44 = arith.mulf %42, %43 : vector<1x8x8x16xf32>
    %45 = arith.addf %40, %44 : vector<1x8x8x16xf32>
    %46 = vector.extract_strided_slice %25 {offsets = [0, 2, 0, 0], sizes = [1, 1, 8, 16], strides = [1, 1, 1, 1]} : vector<1x3x8x16xf32> to vector<1x1x8x16xf32>
    %47 = vector.broadcast %18 : vector<1x8x1x1xf32> to vector<1x8x8x16xf32>
    %48 = vector.broadcast %46 : vector<1x1x8x16xf32> to vector<1x8x8x16xf32>
    %49 = arith.mulf %47, %48 : vector<1x8x8x16xf32>
    %50 = arith.addf %45, %49 : vector<1x8x8x16xf32>
    %51 = vector.extract_strided_slice %26 {offsets = [0, 2, 0, 0], sizes = [1, 1, 8, 16], strides = [1, 1, 1, 1]} : vector<1x3x8x16xf32> to vector<1x1x8x16xf32>
    %52 = vector.broadcast %24 : vector<1x8x1x1xf32> to vector<1x8x8x16xf32>
    %53 = vector.broadcast %51 : vector<1x1x8x16xf32> to vector<1x8x8x16xf32>
    %54 = arith.mulf %52, %53 : vector<1x8x8x16xf32>
    %55 = arith.addf %50, %54 : vector<1x8x8x16xf32>
    %56 = vector.broadcast %5 : vector<1x8x1x1xf32> to vector<1x8x8x16xf32>
    %57 = arith.addf %55, %56 : vector<1x8x8x16xf32>
    %cst_20 = arith.constant 2.000000e-01 : f32
    %cst_21 = arith.constant 8.000000e-01 : f32
    %58 = vector.broadcast %cst_20 : f32 to vector<1x8x8x16xf32>
    %59 = arith.maximumf %58, %57 : vector<1x8x8x16xf32>
    %60 = vector.broadcast %cst_21 : f32 to vector<1x8x8x16xf32>
    %61 = arith.minimumf %60, %59 : vector<1x8x8x16xf32>
    %c0_22 = arith.constant 0 : index
    %c0_23 = arith.constant 0 : index
    %c1 = arith.constant 1 : index
    %c1_24 = arith.constant 1 : index
    %62 = vector.load %arg7[%c0_22, %c0_23, %c1, %c1_24] : memref<1x8x18x18xf32, #tpu.memory_space<vmem>>, vector<1x8x8x16xf32>
    tpu.vector_store %arg7[%c0_22, %c0_23, %c1, %c1_24], %61 {strides = array<i32>} : memref<1x8x18x18xf32, #tpu.memory_space<vmem>>, vector<1x8x8x16xf32>,
    %c0_25 = arith.constant 0 : index
    %c0_26 = arith.constant 0 : index
    %c8 = arith.constant 8 : index
    %c0_27 = arith.constant 0 : index
    %63 = vector.load %arg5[%c0_25, %c0_26, %c8, %c0_27] : memref<1x3x16x16xf32, #tpu.memory_space<vmem>>, vector<1x3x8x16xf32>
    %c0_28 = arith.constant 0 : index
    %c0_29 = arith.constant 0 : index
    %c8_30 = arith.constant 8 : index
    %c0_31 = arith.constant 0 : index
    %64 = vector.load %arg6[%c0_28, %c0_29, %c8_30, %c0_31] : memref<1x3x16x16xf32, #tpu.memory_space<vmem>>, vector<1x3x8x16xf32>
    %65 = vector.extract_strided_slice %63 {offsets = [0, 0, 0, 0], sizes = [1, 1, 8, 16], strides = [1, 1, 1, 1]} : vector<1x3x8x16xf32> to vector<1x1x8x16xf32>
    %66 = vector.broadcast %14 : vector<1x8x1x1xf32> to vector<1x8x8x16xf32>
    %67 = vector.broadcast %65 : vector<1x1x8x16xf32> to vector<1x8x8x16xf32>
    %68 = arith.mulf %66, %67 : vector<1x8x8x16xf32>
    %69 = vector.extract_strided_slice %64 {offsets = [0, 0, 0, 0], sizes = [1, 1, 8, 16], strides = [1, 1, 1, 1]} : vector<1x3x8x16xf32> to vector<1x1x8x16xf32>
    %70 = vector.broadcast %20 : vector<1x8x1x1xf32> to vector<1x8x8x16xf32>
    %71 = vector.broadcast %69 : vector<1x1x8x16xf32> to vector<1x8x8x16xf32>
    %72 = arith.mulf %70, %71 : vector<1x8x8x16xf32>
    %73 = arith.addf %68, %72 : vector<1x8x8x16xf32>
    %74 = vector.extract_strided_slice %63 {offsets = [0, 1, 0, 0], sizes = [1, 1, 8, 16], strides = [1, 1, 1, 1]} : vector<1x3x8x16xf32> to vector<1x1x8x16xf32>
    %75 = vector.broadcast %16 : vector<1x8x1x1xf32> to vector<1x8x8x16xf32>
    %76 = vector.broadcast %74 : vector<1x1x8x16xf32> to vector<1x8x8x16xf32>
    %77 = arith.mulf %75, %76 : vector<1x8x8x16xf32>
    %78 = arith.addf %73, %77 : vector<1x8x8x16xf32>
    %79 = vector.extract_strided_slice %64 {offsets = [0, 1, 0, 0], sizes = [1, 1, 8, 16], strides = [1, 1, 1, 1]} : vector<1x3x8x16xf32> to vector<1x1x8x16xf32>
    %80 = vector.broadcast %22 : vector<1x8x1x1xf32> to vector<1x8x8x16xf32>
    %81 = vector.broadcast %79 : vector<1x1x8x16xf32> to vector<1x8x8x16xf32>
    %82 = arith.mulf %80, %81 : vector<1x8x8x16xf32>
    %83 = arith.addf %78, %82 : vector<1x8x8x16xf32>
    %84 = vector.extract_strided_slice %63 {offsets = [0, 2, 0, 0], sizes = [1, 1, 8, 16], strides = [1, 1, 1, 1]} : vector<1x3x8x16xf32> to vector<1x1x8x16xf32>
    %85 = vector.broadcast %18 : vector<1x8x1x1xf32> to vector<1x8x8x16xf32>
    %86 = vector.broadcast %84 : vector<1x1x8x16xf32> to vector<1x8x8x16xf32>
    %87 = arith.mulf %85, %86 : vector<1x8x8x16xf32>
    %88 = arith.addf %83, %87 : vector<1x8x8x16xf32>
    %89 = vector.extract_strided_slice %64 {offsets = [0, 2, 0, 0], sizes = [1, 1, 8, 16], strides = [1, 1, 1, 1]} : vector<1x3x8x16xf32> to vector<1x1x8x16xf32>
    %90 = vector.broadcast %24 : vector<1x8x1x1xf32> to vector<1x8x8x16xf32>
    %91 = vector.broadcast %89 : vector<1x1x8x16xf32> to vector<1x8x8x16xf32>
    %92 = arith.mulf %90, %91 : vector<1x8x8x16xf32>
    %93 = arith.addf %88, %92 : vector<1x8x8x16xf32>
    %94 = vector.broadcast %5 : vector<1x8x1x1xf32> to vector<1x8x8x16xf32>
    %95 = arith.addf %93, %94 : vector<1x8x8x16xf32>
    %cst_32 = arith.constant 2.000000e-01 : f32
    %cst_33 = arith.constant 8.000000e-01 : f32
    %96 = vector.broadcast %cst_32 : f32 to vector<1x8x8x16xf32>
    %97 = arith.maximumf %96, %95 : vector<1x8x8x16xf32>
    %98 = vector.broadcast %cst_33 : f32 to vector<1x8x8x16xf32>
    %99 = arith.minimumf %98, %97 : vector<1x8x8x16xf32>
    %c0_34 = arith.constant 0 : index
    %c0_35 = arith.constant 0 : index
    %c9 = arith.constant 9 : index
    %c1_36 = arith.constant 1 : index
    %100 = vector.load %arg7[%c0_34, %c0_35, %c9, %c1_36] : memref<1x8x18x18xf32, #tpu.memory_space<vmem>>, vector<1x8x8x16xf32>
    tpu.vector_store %arg7[%c0_34, %c0_35, %c9, %c1_36], %99 {strides = array<i32>} : memref<1x8x18x18xf32, #tpu.memory_space<vmem>>, vector<1x8x8x16xf32>,
    return
  }
  func.func @transform_0(%arg0: i32) -> (i32, i32) {
    %c0_i32 = arith.constant 0 : i32
    %c0_i32_0 = arith.constant 0 : i32
    %c0_i32_1 = arith.constant 0 : i32
    return %c0_i32, %c0_i32_0 : i32, i32
  }
  func.func @transform_1(%arg0: i32) -> (i32, i32) {
    %c0_i32 = arith.constant 0 : i32
    %c0_i32_0 = arith.constant 0 : i32
    %c0_i32_1 = arith.constant 0 : i32
    return %c0_i32, %c0_i32_0 : i32, i32
  }
  func.func @transform_2(%arg0: i32) -> (i32, i32) {
    %c0_i32 = arith.constant 0 : i32
    %c0_i32_0 = arith.constant 0 : i32
    %c0_i32_1 = arith.constant 0 : i32
    return %c0_i32, %c0_i32_0 : i32, i32
  }
  func.func @transform_3(%arg0: i32) -> (i32, i32) {
    %c0_i32 = arith.constant 0 : i32
    %c0_i32_0 = arith.constant 0 : i32
    %c0_i32_1 = arith.constant 0 : i32
    return %c0_i32, %c0_i32_0 : i32, i32
  }
  func.func @transform_4(%arg0: i32) -> (i32, i32, i32, i32) {
    %c0_i32 = arith.constant 0 : i32
    %c0_i32_0 = arith.constant 0 : i32
    %c0_i32_1 = arith.constant 0 : i32
    %c0_i32_2 = arith.constant 0 : i32
    return %arg0, %c0_i32, %c0_i32_0, %c0_i32_1 : i32, i32, i32, i32
  }
  func.func @transform_5(%arg0: i32) -> (i32, i32, i32, i32) {
    %c0_i32 = arith.constant 0 : i32
    %c0_i32_0 = arith.constant 0 : i32
    %c0_i32_1 = arith.constant 0 : i32
    %c0_i32_2 = arith.constant 0 : i32
    return %arg0, %c0_i32, %c0_i32_0, %c0_i32_1 : i32, i32, i32, i32
  }
  func.func @transform_6(%arg0: i32) -> (i32, i32, i32, i32) {
    %c0_i32 = arith.constant 0 : i32
    %c0_i32_0 = arith.constant 0 : i32
    %c0_i32_1 = arith.constant 0 : i32
    %c0_i32_2 = arith.constant 0 : i32
    return %arg0, %c0_i32, %c0_i32_0, %c0_i32_1 : i32, i32, i32, i32
  }
}

</mosaic_0001>

<llo_original>
// kernel: fused_model_forward.1
$region0: #{fused_model_forward.1}
  #allocation0 [shape = 'u32[]', space=smem, size = 0x4, offset = 0x4, fixed_abs, tag = 'smem constant byte address 0x4 - core index']
  #allocation1 [shape = 'u32[144,128]{1,0:T(1,128)}', space=vmem, size = 0x12000, scoped, tag = 'internal scratch']
  %s0 = inlined_call_operand.vmem [shape: f32[8,3], index: 0, kind: input, shape index: {}]
  %s1 = inlined_call_operand.vmem [shape: f32[8,3], index: 1, kind: input, shape index: {}]
  %s2 = inlined_call_operand.vmem [shape: f32[8,1], index: 2, kind: input, shape index: {}]
  %s3 = inlined_call_operand.vmem [shape: f32[8,1], index: 3, kind: input, shape index: {}]
  %s4 = inlined_call_operand.hbm [shape: f32[3,3,16,16], index: 4, kind: input, shape index: {}]
  %s5 = inlined_call_operand.hbm [shape: f32[3,3,16,16], index: 5, kind: input, shape index: {}]
  %s6 = inlined_call_operand.vmem [shape: f32[3,8,18,18], index: 6, kind: output, shape index: {}]
  %s7 = sld [smem:[#allocation0]]
  $region65: #{fused_model_forward.1} parent=0
    _
  %s9 = ssub.s32 1, %s7
  %s10 = scalar_select 0, %s9, %s7
  $region1: #{fused_model_forward.1} parent=0
    #allocation2 [shape = 'u8[49152]{0}', space=vmem, size = 0xc000, scoped, tag = 'input window, operand 4']
    #allocation3 [shape = 's32[2]{0}', space=sflag, size = 0x8, scoped, tag = 'scoped memory for fused_model_forward.1']
    #allocation4 [shape = 'u8[49152]{0}', space=vmem, size = 0xc000, scoped, tag = 'input window, operand 5']
    #allocation5 [shape = 's32[2]{0}', space=sflag, size = 0x8, scoped, tag = 'scoped memory for fused_model_forward.1']
    %11 = vsyncpa [#allocation3], 0
    %s12 = scalar_lea.sflag [#allocation3], 1
    %13 = vsyncpa %s12, 0
    %14 = vsyncpa [#allocation5], 0
    %s15 = scalar_lea.sflag [#allocation5], 1
    %16 = vsyncpa %s15, 0
    loop: start=0, step=1, limit=5
    $region2: #{fused_model_forward.1} parent=1 // loop_pre_header
      _
    $region3: #{fused_model_forward.1} parent=1 // loop_header
      %s18 = sphi 0, %s22
      %p19 = scmp.ge.s32.totalorder %s18, 5
      %s26 = sphi 0, %s26
      %s28 = sphi 0, %s26
      %s29 = sphi 0, %s28
      %s43 = sphi 0, %s29
      %s47 = sphi 0, %s47
      %s49 = sphi 0, %s47
      %s50 = sphi 0, %s49
      %s64 = sphi 0, %s50
      %s68 = sphi 0, %s68
      %s70 = sphi 0, %s68
      %s71 = sphi 0, %s70
      %s85 = sphi 0, %s71
      %s89 = sphi 0, %s89
      %s91 = sphi 0, %s89
      %s92 = sphi 0, %s91
      %s106 = sphi 0, %s92
      %s112 = sphi 0, %s114
      %s115 = sphi 0, %s112
      %s116 = sphi 0, %s115
      %s132 = sphi 0, %s116
      %s138 = sphi 0, %s140
      %s141 = sphi 0, %s138
      %s142 = sphi 0, %s141
      %s158 = sphi 0, %s142
      %s164 = sphi 0, %s166
      %s167 = sphi 0, %s164
      %s168 = sphi 0, %s167
      %s184 = sphi 0, %s168
    $region4: #{fused_model_forward.1} parent=1 // loop_header_branch
      %21 = sbr.rel (%p19) target = $region8
    $region5: #{fused_model_forward.1} parent=1 // loop_body
      %s23 = ssub.s32 %s18, 1
      %s24 = ssub.s32 %s18, 2
      %s25 = sadd.s32 %s18, 1
      %s27 = sadd.s32 %s26, 1
      %p30 = scmp.eq.s32.totalorder %s18, 2
      %p31 = scmp.ne.s32.totalorder %s26, %s28
      %p32 = scmp.eq.s32.totalorder %s18, 0
      %p33 = por %p31, %p32
      %p34 = scmp.ne.s32.totalorder %s26, %s28
      %p35 = scmp.eq.s32.totalorder %s23, 2
      %p36 = por %p34, %p35
      %p37 = scmp.ne.s32.totalorder %s28, %s29
      %p38 = scmp.eq.s32.totalorder %s23, 0
      %p39 = por %p37, %p38
      %p40 = scmp.ne.s32.totalorder %s28, %s29
      %p41 = scmp.eq.s32.totalorder %s24, 2
      %p42 = por %p40, %p41
      %p44 = scmp.ne.s32.totalorder %s29, %s43
      %p45 = scmp.eq.s32.totalorder %s24, 0
      %p46 = por %p44, %p45
      %s48 = sadd.s32 %s47, 1
      %p51 = scmp.eq.s32.totalorder %s18, 2
      %p52 = scmp.ne.s32.totalorder %s47, %s49
      %p53 = scmp.eq.s32.totalorder %s18, 0
      %p54 = por %p52, %p53
      %p55 = scmp.ne.s32.totalorder %s47, %s49
      %p56 = scmp.eq.s32.totalorder %s23, 2
      %p57 = por %p55, %p56
      %p58 = scmp.ne.s32.totalorder %s49, %s50
      %p59 = scmp.eq.s32.totalorder %s23, 0
      %p60 = por %p58, %p59
      %p61 = scmp.ne.s32.totalorder %s49, %s50
      %p62 = scmp.eq.s32.totalorder %s24, 2
      %p63 = por %p61, %p62
      %p65 = scmp.ne.s32.totalorder %s50, %s64
      %p66 = scmp.eq.s32.totalorder %s24, 0
      %p67 = por %p65, %p66
      %s69 = sadd.s32 %s68, 1
      %p72 = scmp.eq.s32.totalorder %s18, 2
      %p73 = scmp.ne.s32.totalorder %s68, %s70
      %p74 = scmp.eq.s32.totalorder %s18, 0
      %p75 = por %p73, %p74
      %p76 = scmp.ne.s32.totalorder %s68, %s70
      %p77 = scmp.eq.s32.totalorder %s23, 2
      %p78 = por %p76, %p77
      %p79 = scmp.ne.s32.totalorder %s70, %s71
      %p80 = scmp.eq.s32.totalorder %s23, 0
      %p81 = por %p79, %p80
      %p82 = scmp.ne.s32.totalorder %s70, %s71
      %p83 = scmp.eq.s32.totalorder %s24, 2
      %p84 = por %p82, %p83
      %p86 = scmp.ne.s32.totalorder %s71, %s85
      %p87 = scmp.eq.s32.totalorder %s24, 0
      %p88 = por %p86, %p87
      %s90 = sadd.s32 %s89, 1
      %p93 = scmp.eq.s32.totalorder %s18, 2
      %p94 = scmp.ne.s32.totalorder %s89, %s91
      %p95 = scmp.eq.s32.totalorder %s18, 0
      %p96 = por %p94, %p95
      %p97 = scmp.ne.s32.totalorder %s89, %s91
      %p98 = scmp.eq.s32.totalorder %s23, 2
      %p99 = por %p97, %p98
      %p100 = scmp.ne.s32.totalorder %s91, %s92
      %p101 = scmp.eq.s32.totalorder %s23, 0
      %p102 = por %p100, %p101
      %p103 = scmp.ne.s32.totalorder %s91, %s92
      %p104 = scmp.eq.s32.totalorder %s24, 2
      %p105 = por %p103, %p104
      %p107 = scmp.ne.s32.totalorder %s92, %s106
      %p108 = scmp.eq.s32.totalorder %s24, 0
      %p109 = por %p107, %p108
      %s110 = ssub.s32 %s18, %s25
      %p111 = scmp.eq.s32.totalorder %s110, 0
      %s113 = sadd.s32 %s112, 1
      %s114 = scalar_select %p111, %s112, %s113
      %p117 = pneg %p111
      %p118 = scmp.eq.s32.totalorder %s18, 2
      %p119 = por %p117, %p118
      %p120 = scmp.ne.s32.totalorder %s112, %s115
      %p121 = scmp.eq.s32.totalorder %s18, 0
      %p122 = por %p120, %p121
      %p123 = scmp.ne.s32.totalorder %s112, %s115
      %p124 = scmp.eq.s32.totalorder %s23, 2
      %p125 = por %p123, %p124
      %p126 = scmp.ne.s32.totalorder %s115, %s116
      %p127 = scmp.eq.s32.totalorder %s23, 0
      %p128 = por %p126, %p127
      %p129 = scmp.ne.s32.totalorder %s115, %s116
      %p130 = scmp.eq.s32.totalorder %s24, 2
      %p131 = por %p129, %p130
      %p133 = scmp.ne.s32.totalorder %s116, %s132
      %p134 = scmp.eq.s32.totalorder %s24, 0
      %p135 = por %p133, %p134
      %s136 = ssub.s32 %s18, %s25
      %p137 = scmp.eq.s32.totalorder %s136, 0
      %s139 = sadd.s32 %s138, 1
      %s140 = scalar_select %p137, %s138, %s139
      %p143 = pneg %p137
      %p144 = scmp.eq.s32.totalorder %s18, 2
      %p145 = por %p143, %p144
      %p146 = scmp.ne.s32.totalorder %s138, %s141
      %p147 = scmp.eq.s32.totalorder %s18, 0
      %p148 = por %p146, %p147
      %p149 = scmp.ne.s32.totalorder %s138, %s141
      %p150 = scmp.eq.s32.totalorder %s23, 2
      %p151 = por %p149, %p150
      %p152 = scmp.ne.s32.totalorder %s141, %s142
      %p153 = scmp.eq.s32.totalorder %s23, 0
      %p154 = por %p152, %p153
      %p155 = scmp.ne.s32.totalorder %s141, %s142
      %p156 = scmp.eq.s32.totalorder %s24, 2
      %p157 = por %p155, %p156
      %p159 = scmp.ne.s32.totalorder %s142, %s158
      %p160 = scmp.eq.s32.totalorder %s24, 0
      %p161 = por %p159, %p160
      %s162 = ssub.s32 %s18, %s25
      %p163 = scmp.eq.s32.totalorder %s162, 0
      %s165 = sadd.s32 %s164, 1
      %s166 = scalar_select %p163, %s164, %s165
      %p169 = pneg %p163
      %p170 = scmp.eq.s32.totalorder %s18, 2
      %p171 = por %p169, %p170
      %p172 = scmp.ne.s32.totalorder %s164, %s167
      %p173 = scmp.eq.s32.totalorder %s18, 0
      %p174 = por %p172, %p173
      %p175 = scmp.ne.s32.totalorder %s164, %s167
      %p176 = scmp.eq.s32.totalorder %s23, 2
      %p177 = por %p175, %p176
      %p178 = scmp.ne.s32.totalorder %s167, %s168
      %p179 = scmp.eq.s32.totalorder %s23, 0
      %p180 = por %p178, %p179
      %p181 = scmp.ne.s32.totalorder %s167, %s168
      %p182 = scmp.eq.s32.totalorder %s24, 2
      %p183 = por %p181, %p182
      %p185 = scmp.ne.s32.totalorder %s168, %s184
      %p186 = scmp.eq.s32.totalorder %s24, 0
      %p187 = por %p185, %p186
      %p188 = scmp.le.s32.totalorder 1, %s18
      %p189 = scmp.lt.s32.totalorder %s18, 4
      %p190 = pnand %p188, %p189
      %p191 = pneg %p190
      // Predicated region
      $region9: #{fused_model_forward.1} parent=5 // pred_check
        _
      $region10: #{fused_model_forward.1} parent=5 // pred_check_branch
        %193 = sbr.rel (%p190) target = $region12
      $region11: #{fused_model_forward.1} parent=5 // pred_region
        %s194 = ssub.s32 %s18, 1
        // Predicated region
        $region13: #{fused_model_forward.1} parent=11 // pred_check
          %p195 = pneg %p39
        $region14: #{fused_model_forward.1} parent=11 // pred_check_branch
          %197 = sbr.rel (%p195) target = $region16
        $region15: #{fused_model_forward.1} parent=11 // pred_region
          _
        $region16: #{fused_model_forward.1} parent=11 // pred_fallthru
          _
        // Predicated region
        $region17: #{fused_model_forward.1} parent=11 // pred_check
          %p198 = pneg %p60
        $region18: #{fused_model_forward.1} parent=11 // pred_check_branch
          %200 = sbr.rel (%p198) target = $region20
        $region19: #{fused_model_forward.1} parent=11 // pred_region
          _
        $region20: #{fused_model_forward.1} parent=11 // pred_fallthru
          _
        // Predicated region
        $region21: #{fused_model_forward.1} parent=11 // pred_check
          %p201 = pneg %p81
        $region22: #{fused_model_forward.1} parent=11 // pred_check_branch
          %203 = sbr.rel (%p201) target = $region24
        $region23: #{fused_model_forward.1} parent=11 // pred_region
          _
        $region24: #{fused_model_forward.1} parent=11 // pred_fallthru
          _
        // Predicated region
        $region25: #{fused_model_forward.1} parent=11 // pred_check
          %p204 = pneg %p102
        $region26: #{fused_model_forward.1} parent=11 // pred_check_branch
          %206 = sbr.rel (%p204) target = $region28
        $region27: #{fused_model_forward.1} parent=11 // pred_region
          _
        $region28: #{fused_model_forward.1} parent=11 // pred_fallthru
          _
      $region12: #{fused_model_forward.1} parent=5 // pred_fallthru
        _
      %p207 = scmp.lt.s32.totalorder %s18, 3
      // Predicated region
      $region29: #{fused_model_forward.1} parent=5 // pred_check
        %p208 = pneg %p207
      $region30: #{fused_model_forward.1} parent=5 // pred_check_branch
        %210 = sbr.rel (%p208) target = $region32
      $region31: #{fused_model_forward.1} parent=5 // pred_region
        // Predicated region
        $region33: #{fused_model_forward.1} parent=31 // pred_check
          %p211 = pneg %p122
        $region34: #{fused_model_forward.1} parent=31 // pred_check_branch
          %213 = sbr.rel (%p211) target = $region36
        $region35: #{fused_model_forward.1} parent=31 // pred_region
          %s214 = sand.u32 %s112, 1
          %s215 = scalar_lea.sflag [#allocation3], %s214
          %s216 = sand.u32 %s112, 1
          %s217 = smul.addr %s216, 48
          %s218 = scalar_lea.vmem [#allocation2], %s217
          %s220 = ssub.s32 768, 768
          %221 = vsyncadd %s215, %s220
          %s222 = smul.addr %s18, 6
          %s223 = smul.addr %s222, 128
          %s224 = scalar_lea.hbm %s4, %s223
          %s225 = sshll.u32 %s218, 4
          %s226 = int_to_ptr.vmem [resolvable:$true] %s225
          %231 = dma.hbm_to_vmem [thread:$0]  %s224, 768, %s226, %s215, 128, 128, 8
        $region36: #{fused_model_forward.1} parent=31 // pred_fallthru
          _
        // Predicated region
        $region37: #{fused_model_forward.1} parent=31 // pred_check
          %p232 = pneg %p148
        $region38: #{fused_model_forward.1} parent=31 // pred_check_branch
          %234 = sbr.rel (%p232) target = $region40
        $region39: #{fused_model_forward.1} parent=31 // pred_region
          %s235 = sand.u32 %s138, 1
          %s236 = scalar_lea.sflag [#allocation5], %s235
          %s237 = sand.u32 %s138, 1
          %s238 = smul.addr %s237, 48
          %s239 = scalar_lea.vmem [#allocation4], %s238
          %s241 = ssub.s32 768, 768
          %242 = vsyncadd %s236, %s241
          %s243 = smul.addr %s18, 6
          %s244 = smul.addr %s243, 128
          %s245 = scalar_lea.hbm %s5, %s244
          %s246 = sshll.u32 %s239, 4
          %s247 = int_to_ptr.vmem [resolvable:$true] %s246
          %252 = dma.hbm_to_vmem [thread:$0]  %s245, 768, %s247, %s236, 128, 128, 8
        $region40: #{fused_model_forward.1} parent=31 // pred_fallthru
          _
      $region32: #{fused_model_forward.1} parent=5 // pred_fallthru
        _
      %p253 = scmp.le.s32.totalorder 1, %s18
      %p254 = scmp.lt.s32.totalorder %s18, 4
      %p255 = pnand %p253, %p254
      %p256 = pneg %p255
      // Predicated region
      $region41: #{fused_model_forward.1} parent=5 // pred_check
        _
      $region42: #{fused_model_forward.1} parent=5 // pred_check_branch
        %258 = sbr.rel (%p255) target = $region44
      $region43: #{fused_model_forward.1} parent=5 // pred_region
        %s259 = ssub.s32 %s18, 1
        %s260 = sand.u32 %s115, 1
        %s261 = scalar_lea.sflag [#allocation3], %s260
        %s262 = sand.u32 %s115, 1
        %s263 = smul.addr %s262, 48
        %s264 = scalar_lea.vmem [#allocation2], %s263
        // Predicated region
        $region45: #{fused_model_forward.1} parent=43 // pred_check
          %p265 = pneg %p128
        $region46: #{fused_model_forward.1} parent=43 // pred_check_branch
          %267 = sbr.rel (%p265) target = $region48
        $region47: #{fused_model_forward.1} parent=43 // pred_region
          %268 = dma.done %s261, 768
        $region48: #{fused_model_forward.1} parent=43 // pred_fallthru
          _
        %s269 = sand.u32 %s141, 1
        %s270 = scalar_lea.sflag [#allocation5], %s269
        %s271 = sand.u32 %s141, 1
        %s272 = smul.addr %s271, 48
        %s273 = scalar_lea.vmem [#allocation4], %s272
        // Predicated region
        $region49: #{fused_model_forward.1} parent=43 // pred_check
          %p274 = pneg %p154
        $region50: #{fused_model_forward.1} parent=43 // pred_check_branch
          %276 = sbr.rel (%p274) target = $region52
        $region51: #{fused_model_forward.1} parent=43 // pred_region
          %277 = dma.done %s270, 768
        $region52: #{fused_model_forward.1} parent=43 // pred_fallthru
          _
        %p278 = pneg %p39
        %p279 = pneg %p36
        %p280 = pneg %p60
        %p281 = pneg %p57
        %p282 = pneg %p81
        %p283 = pneg %p78
        %p284 = pneg %p102
        %p285 = pneg %p99
        %s286 = sand.u32 %s115, 1
        %s287 = scalar_lea.sflag [#allocation3], %s286
        %s288 = sand.u32 %s115, 1
        %s289 = smul.addr %s288, 48
        %s290 = scalar_lea.vmem [#allocation2], %s289
        %p291 = pneg %p128
        %p292 = pneg %p125
        %s293 = sand.u32 %s141, 1
        %s294 = scalar_lea.sflag [#allocation5], %s293
        %s295 = sand.u32 %s141, 1
        %s296 = smul.addr %s295, 48
        %s297 = scalar_lea.vmem [#allocation4], %s296
        %p298 = pneg %p154
        %p299 = pneg %p151
        %p300 = pneg %p180
        %p301 = pneg %p177
        %p302 = scmp.lt.s32.totalorder %s23, 2
        %s303 = scalar_select %p302, %s23, 2
        %s304 = smul.addr %s303, 24
        %s305 = smul.addr %s304, 8
        %s306 = scalar_lea.vmem %s6, %s305
        %p307 = scmp.lt.s32.totalorder %s23, 2
        %s308 = scalar_select %p307, %s23, 2
        %s309 = smul.addr %s308, 24
        %s310 = smul.addr %s309, 8
        %s311 = scalar_lea.vmem %s6, %s310
        %v312 = vld [vmem:[%s0] sm:$0xff]
        %v313 = vld [vmem:[%s1] sm:$0xff]
        %v314 = vld [vmem:[%s2] sm:$0xff]
        %v315 = vld [vmem:[%s3] sm:$0xff]
        %v316 = vadd.f32 %v314, %v315
        %v318 = vcombine.high %v316, %v316
        %v320 = vunpack.c.l.s4 1966171168
        %v321 = vunpack.c.0.s8 %v320
        %v322 = vlaneseq
        %v323 = vshrl.u32 %v322, 7
        %v324 = vsub.s32 %v321, %v323
        %v325 = vrot.slane %v316, %v324
        %v327 = vunpack.c.l.s4 1966171168
        %v328 = vunpack.c.0.s8 %v327
        %v329 = vlaneseq
        %v330 = vshrl.u32 %v329, 7
        %v331 = vsub.s32 %v328, %v330
        %v332 = vrot.slane %v318, %v331
        %v333 = vcombine.high %v325, %v325
        %v334 = vcombine.high %v332, %v332
        %v336 = vunpack.c.l.s4 1966171168
        %v337 = vunpack.c.0.s8 %v336
        %v338 = vlaneseq
        %v339 = vshrl.u32 %v338, 7
        %v340 = vsub.s32 %v337, %v339
        %v341 = vrot.slane %v325, %v340
        %v343 = vunpack.c.l.s4 1966171168
        %v344 = vunpack.c.0.s8 %v343
        %v345 = vlaneseq
        %v346 = vshrl.u32 %v345, 7
        %v347 = vsub.s32 %v344, %v346
        %v348 = vrot.slane %v332, %v347
        %v350 = vunpack.c.l.s4 1966171168
        %v351 = vunpack.c.0.s8 %v350
        %v352 = vlaneseq
        %v353 = vshrl.u32 %v352, 7
        %v354 = vsub.s32 %v351, %v353
        %v355 = vrot.slane %v333, %v354
        %v357 = vunpack.c.l.s4 1966171168
        %v358 = vunpack.c.0.s8 %v357
        %v359 = vlaneseq
        %v360 = vshrl.u32 %v359, 7
        %v361 = vsub.s32 %v358, %v360
        %v362 = vrot.slane %v334, %v361
        %v363 = vcombine.high %v341, %v341
        %v364 = vcombine.high %v348, %v348
        %v365 = vcombine.high %v355, %v355
        %v366 = vcombine.high %v362, %v362
        %v375 = vmax.f32 %v341, 0.2
        %v376 = vmax.f32 %v355, 0.2
        %v377 = vmax.f32 %v363, 0.2
        %v378 = vmax.f32 %v365, 0.2
        %v379 = vmax.f32 %v348, 0.2
        %v380 = vmax.f32 %v362, 0.2
        %v381 = vmax.f32 %v364, 0.2
        %v382 = vmax.f32 %v366, 0.2
        %v383 = vmin.f32 %v375, 0.8
        %v384 = vmin.f32 %v376, 0.8
        %v385 = vmin.f32 %v377, 0.8
        %v386 = vmin.f32 %v378, 0.8
        %v387 = vmin.f32 %v379, 0.8
        %v388 = vmin.f32 %v380, 0.8
        %v389 = vmin.f32 %v381, 0.8
        %v390 = vmin.f32 %v382, 0.8
        %v399 = vlaneseq
        %v400 = vshrl.u32 %v399, 7
        %v401 = vsub.s32 0, %v400
        %v402 = vrot.slane %v383, %v401
        %v403 = vlaneseq
        %v404 = vshrl.u32 %v403, 7
        %v405 = vsub.s32 0, %v404
        %v406 = vrot.slane %v384, %v405
        %v407 = vlaneseq
        %v408 = vshrl.u32 %v407, 7
        %v409 = vsub.s32 0, %v408
        %v410 = vrot.slane %v385, %v409
        %v411 = vlaneseq
        %v412 = vshrl.u32 %v411, 7
        %v413 = vsub.s32 0, %v412
        %v414 = vrot.slane %v386, %v413
        %v415 = vlaneseq
        %v416 = vshrl.u32 %v415, 7
        %v417 = vsub.s32 0, %v416
        %v418 = vrot.slane %v387, %v417
        %v419 = vlaneseq
        %v420 = vshrl.u32 %v419, 7
        %v421 = vsub.s32 0, %v420
        %v422 = vrot.slane %v388, %v421
        %v423 = vlaneseq
        %v424 = vshrl.u32 %v423, 7
        %v425 = vsub.s32 0, %v424
        %v426 = vrot.slane %v389, %v425
        %v427 = vlaneseq
        %v428 = vshrl.u32 %v427, 7
        %v429 = vsub.s32 0, %v428
        %v430 = vrot.slane %v390, %v429
        %431 = vset.pattern.permute.xlu0 0
        %432 = vperm.xlu0 %431, %v402
        %v433 = vpop.permute.xlu0 %432
        %435 = vset.pattern.permute.xlu0 0
        %436 = vperm.xlu0 %435, %v406
        %v437 = vpop.permute.xlu0 %436
        %439 = vset.pattern.permute.xlu0 0
        %440 = vperm.xlu0 %439, %v410
        %v441 = vpop.permute.xlu0 %440
        %443 = vset.pattern.permute.xlu0 0
        %444 = vperm.xlu0 %443, %v414
        %v445 = vpop.permute.xlu0 %444
        %447 = vset.pattern.permute.xlu0 0
        %448 = vperm.xlu0 %447, %v418
        %v449 = vpop.permute.xlu0 %448
        %451 = vset.pattern.permute.xlu0 0
        %452 = vperm.xlu0 %451, %v422
        %v453 = vpop.permute.xlu0 %452
        %455 = vset.pattern.permute.xlu0 0
        %456 = vperm.xlu0 %455, %v426
        %v457 = vpop.permute.xlu0 %456
        %459 = vset.pattern.permute.xlu0 0
        %460 = vperm.xlu0 %459, %v430
        %v461 = vpop.permute.xlu0 %460
        %vm463 = vcmask 146432
        %464 = vst.msk [vmem:[%s311] sm:$0xff] %vm463, %v433
        %465 = vst.msk [vmem:[%s311 + $0x8] sm:$0xff] %vm463, %v433
        %vm466 = vcmask 140288
        %467 = vst.msk [vmem:[%s311 + $0x10] sm:$0x3] %vm466, %v433
        %468 = vst.msk [vmem:[%s311 + $0x18] sm:$0xff] %vm463, %v437
        %469 = vst.msk [vmem:[%s311 + $0x20] sm:$0xff] %vm463, %v437
        %470 = vst.msk [vmem:[%s311 + $0x28] sm:$0x3] %vm466, %v437
        %471 = vst.msk [vmem:[%s311 + $0x30] sm:$0xff] %vm463, %v441
        %472 = vst.msk [vmem:[%s311 + $0x38] sm:$0xff] %vm463, %v441
        %473 = vst.msk [vmem:[%s311 + $0x40] sm:$0x3] %vm466, %v441
        %474 = vst.msk [vmem:[%s311 + $0x48] sm:$0xff] %vm463, %v445
        %475 = vst.msk [vmem:[%s311 + $0x50] sm:$0xff] %vm463, %v445
        %476 = vst.msk [vmem:[%s311 + $0x58] sm:$0x3] %vm466, %v445
        %477 = vst.msk [vmem:[%s311 + $0x60] sm:$0xff] %vm463, %v449
        %478 = vst.msk [vmem:[%s311 + $0x68] sm:$0xff] %vm463, %v449
        %479 = vst.msk [vmem:[%s311 + $0x70] sm:$0x3] %vm466, %v449
        %480 = vst.msk [vmem:[%s311 + $0x78] sm:$0xff] %vm463, %v453
        %481 = vst.msk [vmem:[%s311 + $0x80] sm:$0xff] %vm463, %v453
        %482 = vst.msk [vmem:[%s311 + $0x88] sm:$0x3] %vm466, %v453
        %483 = vst.msk [vmem:[%s311 + $0x90] sm:$0xff] %vm463, %v457
        %484 = vst.msk [vmem:[%s311 + $0x98] sm:$0xff] %vm463, %v457
        %485 = vst.msk [vmem:[%s311 + $0xa0] sm:$0x3] %vm466, %v457
        %486 = vst.msk [vmem:[%s311 + $0xa8] sm:$0xff] %vm463, %v461
        %487 = vst.msk [vmem:[%s311 + $0xb0] sm:$0xff] %vm463, %v461
        %488 = vst.msk [vmem:[%s311 + $0xb8] sm:$0x3] %vm466, %v461
        %v490 = vcombine.high %v312, %v312
        %v492 = vunpack.c.l.s4 1966171168
        %v493 = vunpack.c.0.s8 %v492
        %v494 = vlaneseq
        %v495 = vshrl.u32 %v494, 7
        %v496 = vsub.s32 %v493, %v495
        %v497 = vrot.slane %v312, %v496
        %v499 = vunpack.c.l.s4 1966171168
        %v500 = vunpack.c.0.s8 %v499
        %v501 = vlaneseq
        %v502 = vshrl.u32 %v501, 7
        %v503 = vsub.s32 %v500, %v502
        %v504 = vrot.slane %v490, %v503
        %v505 = vcombine.high %v497, %v497
        %v506 = vcombine.high %v504, %v504
        %v508 = vunpack.c.l.s4 1966171168
        %v509 = vunpack.c.0.s8 %v508
        %v510 = vlaneseq
        %v511 = vshrl.u32 %v510, 7
        %v512 = vsub.s32 %v509, %v511
        %v513 = vrot.slane %v497, %v512
        %v515 = vunpack.c.l.s4 1966171168
        %v516 = vunpack.c.0.s8 %v515
        %v517 = vlaneseq
        %v518 = vshrl.u32 %v517, 7
        %v519 = vsub.s32 %v516, %v518
        %v520 = vrot.slane %v504, %v519
        %v522 = vunpack.c.l.s4 1966171168
        %v523 = vunpack.c.0.s8 %v522
        %v524 = vlaneseq
        %v525 = vshrl.u32 %v524, 7
        %v526 = vsub.s32 %v523, %v525
        %v527 = vrot.slane %v505, %v526
        %v529 = vunpack.c.l.s4 1966171168
        %v530 = vunpack.c.0.s8 %v529
        %v531 = vlaneseq
        %v532 = vshrl.u32 %v531, 7
        %v533 = vsub.s32 %v530, %v532
        %v534 = vrot.slane %v506, %v533
        %v535 = vcombine.high %v513, %v513
        %v536 = vcombine.high %v520, %v520
        %v537 = vcombine.high %v527, %v527
        %v538 = vcombine.high %v534, %v534
        %v540 = vcombine.high %v313, %v313
        %v542 = vunpack.c.l.s4 1966171168
        %v543 = vunpack.c.0.s8 %v542
        %v544 = vlaneseq
        %v545 = vshrl.u32 %v544, 7
        %v546 = vsub.s32 %v543, %v545
        %v547 = vrot.slane %v313, %v546
        %v549 = vunpack.c.l.s4 1966171168
        %v550 = vunpack.c.0.s8 %v549
        %v551 = vlaneseq
        %v552 = vshrl.u32 %v551, 7
        %v553 = vsub.s32 %v550, %v552
        %v554 = vrot.slane %v540, %v553
        %v555 = vcombine.high %v547, %v547
        %v556 = vcombine.high %v554, %v554
        %v558 = vunpack.c.l.s4 1966171168
        %v559 = vunpack.c.0.s8 %v558
        %v560 = vlaneseq
        %v561 = vshrl.u32 %v560, 7
        %v562 = vsub.s32 %v559, %v561
        %v563 = vrot.slane %v547, %v562
        %v565 = vunpack.c.l.s4 1966171168
        %v566 = vunpack.c.0.s8 %v565
        %v567 = vlaneseq
        %v568 = vshrl.u32 %v567, 7
        %v569 = vsub.s32 %v566, %v568
        %v570 = vrot.slane %v554, %v569
        %v572 = vunpack.c.l.s4 1966171168
        %v573 = vunpack.c.0.s8 %v572
        %v574 = vlaneseq
        %v575 = vshrl.u32 %v574, 7
        %v576 = vsub.s32 %v573, %v575
        %v577 = vrot.slane %v555, %v576
        %v579 = vunpack.c.l.s4 1966171168
        %v580 = vunpack.c.0.s8 %v579
        %v581 = vlaneseq
        %v582 = vshrl.u32 %v581, 7
        %v583 = vsub.s32 %v580, %v582
        %v584 = vrot.slane %v556, %v583
        %v585 = vcombine.high %v563, %v563
        %v586 = vcombine.high %v570, %v570
        %v587 = vcombine.high %v577, %v577
        %v588 = vcombine.high %v584, %v584
        %v589 = vld [vmem:[%s264] sm:$0xff]
        %v590 = vld [vmem:[%s264 + $0x10] sm:$0xff]
        %v591 = vld [vmem:[%s264 + $0x20] sm:$0xff]
        %v592 = vld [vmem:[%s273] sm:$0xff]
        %v593 = vld [vmem:[%s273 + $0x10] sm:$0xff]
        %v594 = vld [vmem:[%s273 + $0x20] sm:$0xff]
        %v595 = vlaneseq
        %v596 = vshrl.u32 %v595, 7
        %v597 = vsub.s32 0, %v596
        %v598 = vrot.slane %v513, %v597
        %v599 = vlaneseq
        %v600 = vshrl.u32 %v599, 7
        %v601 = vsub.s32 0, %v600
        %v602 = vrot.slane %v527, %v601
        %v603 = vlaneseq
        %v604 = vshrl.u32 %v603, 7
        %v605 = vsub.s32 0, %v604
        %v606 = vrot.slane %v535, %v605
        %v607 = vlaneseq
        %v608 = vshrl.u32 %v607, 7
        %v609 = vsub.s32 0, %v608
        %v610 = vrot.slane %v537, %v609
        %v611 = vlaneseq
        %v612 = vshrl.u32 %v611, 7
        %v613 = vsub.s32 0, %v612
        %v614 = vrot.slane %v520, %v613
        %v615 = vlaneseq
        %v616 = vshrl.u32 %v615, 7
        %v617 = vsub.s32 0, %v616
        %v618 = vrot.slane %v534, %v617
        %v619 = vlaneseq
        %v620 = vshrl.u32 %v619, 7
        %v621 = vsub.s32 0, %v620
        %v622 = vrot.slane %v536, %v621
        %v623 = vlaneseq
        %v624 = vshrl.u32 %v623, 7
        %v625 = vsub.s32 0, %v624
        %v626 = vrot.slane %v538, %v625
        %627 = vset.pattern.permute.xlu0 0
        %628 = vperm.xlu0 %627, %v598
        %v629 = vpop.permute.xlu0 %628
        %631 = vset.pattern.permute.xlu0 0
        %632 = vperm.xlu0 %631, %v602
        %v633 = vpop.permute.xlu0 %632
        %635 = vset.pattern.permute.xlu0 0
        %636 = vperm.xlu0 %635, %v606
        %v637 = vpop.permute.xlu0 %636
        %639 = vset.pattern.permute.xlu0 0
        %640 = vperm.xlu0 %639, %v610
        %v641 = vpop.permute.xlu0 %640
        %643 = vset.pattern.permute.xlu0 0
        %644 = vperm.xlu0 %643, %v614
        %v645 = vpop.permute.xlu0 %644
        %647 = vset.pattern.permute.xlu0 0
        %648 = vperm.xlu0 %647, %v618
        %v649 = vpop.permute.xlu0 %648
        %651 = vset.pattern.permute.xlu0 0
        %652 = vperm.xlu0 %651, %v622
        %v653 = vpop.permute.xlu0 %652
        %655 = vset.pattern.permute.xlu0 0
        %656 = vperm.xlu0 %655, %v626
        %v657 = vpop.permute.xlu0 %656
        %v659 = vmul.f32 %v629, %v589
        %v660 = vmul.f32 %v633, %v589
        %v661 = vmul.f32 %v637, %v589
        %v662 = vmul.f32 %v641, %v589
        %v663 = vmul.f32 %v645, %v589
        %v664 = vmul.f32 %v649, %v589
        %v665 = vmul.f32 %v653, %v589
        %v666 = vmul.f32 %v657, %v589
        %v667 = vlaneseq
        %v668 = vshrl.u32 %v667, 7
        %v669 = vsub.s32 0, %v668
        %v670 = vrot.slane %v563, %v669
        %v671 = vlaneseq
        %v672 = vshrl.u32 %v671, 7
        %v673 = vsub.s32 0, %v672
        %v674 = vrot.slane %v577, %v673
        %v675 = vlaneseq
        %v676 = vshrl.u32 %v675, 7
        %v677 = vsub.s32 0, %v676
        %v678 = vrot.slane %v585, %v677
        %v679 = vlaneseq
        %v680 = vshrl.u32 %v679, 7
        %v681 = vsub.s32 0, %v680
        %v682 = vrot.slane %v587, %v681
        %v683 = vlaneseq
        %v684 = vshrl.u32 %v683, 7
        %v685 = vsub.s32 0, %v684
        %v686 = vrot.slane %v570, %v685
        %v687 = vlaneseq
        %v688 = vshrl.u32 %v687, 7
        %v689 = vsub.s32 0, %v688
        %v690 = vrot.slane %v584, %v689
        %v691 = vlaneseq
        %v692 = vshrl.u32 %v691, 7
        %v693 = vsub.s32 0, %v692
        %v694 = vrot.slane %v586, %v693
        %v695 = vlaneseq
        %v696 = vshrl.u32 %v695, 7
        %v697 = vsub.s32 0, %v696
        %v698 = vrot.slane %v588, %v697
        %699 = vset.pattern.permute.xlu0 0
        %700 = vperm.xlu0 %699, %v670
        %v701 = vpop.permute.xlu0 %700
        %703 = vset.pattern.permute.xlu0 0
        %704 = vperm.xlu0 %703, %v674
        %v705 = vpop.permute.xlu0 %704
        %707 = vset.pattern.permute.xlu0 0
        %708 = vperm.xlu0 %707, %v678
        %v709 = vpop.permute.xlu0 %708
        %711 = vset.pattern.permute.xlu0 0
        %712 = vperm.xlu0 %711, %v682
        %v713 = vpop.permute.xlu0 %712
        %715 = vset.pattern.permute.xlu0 0
        %716 = vperm.xlu0 %715, %v686
        %v717 = vpop.permute.xlu0 %716
        %719 = vset.pattern.permute.xlu0 0
        %720 = vperm.xlu0 %719, %v690
        %v721 = vpop.permute.xlu0 %720
        %723 = vset.pattern.permute.xlu0 0
        %724 = vperm.xlu0 %723, %v694
        %v725 = vpop.permute.xlu0 %724
        %727 = vset.pattern.permute.xlu0 0
        %728 = vperm.xlu0 %727, %v698
        %v729 = vpop.permute.xlu0 %728
        %v731 = vmul.f32 %v701, %v592
        %v732 = vmul.f32 %v705, %v592
        %v733 = vmul.f32 %v709, %v592
        %v734 = vmul.f32 %v713, %v592
        %v735 = vmul.f32 %v717, %v592
        %v736 = vmul.f32 %v721, %v592
        %v737 = vmul.f32 %v725, %v592
        %v738 = vmul.f32 %v729, %v592
        %v739 = vadd.f32 %v659, %v731
        %v740 = vadd.f32 %v660, %v732
        %v741 = vadd.f32 %v661, %v733
        %v742 = vadd.f32 %v662, %v734
        %v743 = vadd.f32 %v663, %v735
        %v744 = vadd.f32 %v664, %v736
        %v745 = vadd.f32 %v665, %v737
        %v746 = vadd.f32 %v666, %v738
        %747 = vset.pattern.permute.xlu0 1
        %748 = vperm.xlu0 %747, %v598
        %v749 = vpop.permute.xlu0 %748
        %751 = vset.pattern.permute.xlu0 1
        %752 = vperm.xlu0 %751, %v602
        %v753 = vpop.permute.xlu0 %752
        %755 = vset.pattern.permute.xlu0 1
        %756 = vperm.xlu0 %755, %v606
        %v757 = vpop.permute.xlu0 %756
        %759 = vset.pattern.permute.xlu0 1
        %760 = vperm.xlu0 %759, %v610
        %v761 = vpop.permute.xlu0 %760
        %763 = vset.pattern.permute.xlu0 1
        %764 = vperm.xlu0 %763, %v614
        %v765 = vpop.permute.xlu0 %764
        %767 = vset.pattern.permute.xlu0 1
        %768 = vperm.xlu0 %767, %v618
        %v769 = vpop.permute.xlu0 %768
        %771 = vset.pattern.permute.xlu0 1
        %772 = vperm.xlu0 %771, %v622
        %v773 = vpop.permute.xlu0 %772
        %775 = vset.pattern.permute.xlu0 1
        %776 = vperm.xlu0 %775, %v626
        %v777 = vpop.permute.xlu0 %776
        %v779 = vmul.f32 %v749, %v590
        %v780 = vmul.f32 %v753, %v590
        %v781 = vmul.f32 %v757, %v590
        %v782 = vmul.f32 %v761, %v590
        %v783 = vmul.f32 %v765, %v590
        %v784 = vmul.f32 %v769, %v590
        %v785 = vmul.f32 %v773, %v590
        %v786 = vmul.f32 %v777, %v590
        %v787 = vadd.f32 %v739, %v779
        %v788 = vadd.f32 %v740, %v780
        %v789 = vadd.f32 %v741, %v781
        %v790 = vadd.f32 %v742, %v782
        %v791 = vadd.f32 %v743, %v783
        %v792 = vadd.f32 %v744, %v784
        %v793 = vadd.f32 %v745, %v785
        %v794 = vadd.f32 %v746, %v786
        %795 = vset.pattern.permute.xlu0 1
        %796 = vperm.xlu0 %795, %v670
        %v797 = vpop.permute.xlu0 %796
        %799 = vset.pattern.permute.xlu0 1
        %800 = vperm.xlu0 %799, %v674
        %v801 = vpop.permute.xlu0 %800
        %803 = vset.pattern.permute.xlu0 1
        %804 = vperm.xlu0 %803, %v678
        %v805 = vpop.permute.xlu0 %804
        %807 = vset.pattern.permute.xlu0 1
        %808 = vperm.xlu0 %807, %v682
        %v809 = vpop.permute.xlu0 %808
        %811 = vset.pattern.permute.xlu0 1
        %812 = vperm.xlu0 %811, %v686
        %v813 = vpop.permute.xlu0 %812
        %815 = vset.pattern.permute.xlu0 1
        %816 = vperm.xlu0 %815, %v690
        %v817 = vpop.permute.xlu0 %816
        %819 = vset.pattern.permute.xlu0 1
        %820 = vperm.xlu0 %819, %v694
        %v821 = vpop.permute.xlu0 %820
        %823 = vset.pattern.permute.xlu0 1
        %824 = vperm.xlu0 %823, %v698
        %v825 = vpop.permute.xlu0 %824
        %v827 = vmul.f32 %v797, %v593
        %v828 = vmul.f32 %v801, %v593
        %v829 = vmul.f32 %v805, %v593
        %v830 = vmul.f32 %v809, %v593
        %v831 = vmul.f32 %v813, %v593
        %v832 = vmul.f32 %v817, %v593
        %v833 = vmul.f32 %v821, %v593
        %v834 = vmul.f32 %v825, %v593
        %v835 = vadd.f32 %v787, %v827
        %v836 = vadd.f32 %v788, %v828
        %v837 = vadd.f32 %v789, %v829
        %v838 = vadd.f32 %v790, %v830
        %v839 = vadd.f32 %v791, %v831
        %v840 = vadd.f32 %v792, %v832
        %v841 = vadd.f32 %v793, %v833
        %v842 = vadd.f32 %v794, %v834
        %843 = vset.pattern.permute.xlu0 2
        %844 = vperm.xlu0 %843, %v598
        %v845 = vpop.permute.xlu0 %844
        %847 = vset.pattern.permute.xlu0 2
        %848 = vperm.xlu0 %847, %v602
        %v849 = vpop.permute.xlu0 %848
        %851 = vset.pattern.permute.xlu0 2
        %852 = vperm.xlu0 %851, %v606
        %v853 = vpop.permute.xlu0 %852
        %855 = vset.pattern.permute.xlu0 2
        %856 = vperm.xlu0 %855, %v610
        %v857 = vpop.permute.xlu0 %856
        %859 = vset.pattern.permute.xlu0 2
        %860 = vperm.xlu0 %859, %v614
        %v861 = vpop.permute.xlu0 %860
        %863 = vset.pattern.permute.xlu0 2
        %864 = vperm.xlu0 %863, %v618
        %v865 = vpop.permute.xlu0 %864
        %867 = vset.pattern.permute.xlu0 2
        %868 = vperm.xlu0 %867, %v622
        %v869 = vpop.permute.xlu0 %868
        %871 = vset.pattern.permute.xlu0 2
        %872 = vperm.xlu0 %871, %v626
        %v873 = vpop.permute.xlu0 %872
        %v875 = vmul.f32 %v845, %v591
        %v876 = vmul.f32 %v849, %v591
        %v877 = vmul.f32 %v853, %v591
        %v878 = vmul.f32 %v857, %v591
        %v879 = vmul.f32 %v861, %v591
        %v880 = vmul.f32 %v865, %v591
        %v881 = vmul.f32 %v869, %v591
        %v882 = vmul.f32 %v873, %v591
        %v883 = vadd.f32 %v835, %v875
        %v884 = vadd.f32 %v836, %v876
        %v885 = vadd.f32 %v837, %v877
        %v886 = vadd.f32 %v838, %v878
        %v887 = vadd.f32 %v839, %v879
        %v888 = vadd.f32 %v840, %v880
        %v889 = vadd.f32 %v841, %v881
        %v890 = vadd.f32 %v842, %v882
        %891 = vset.pattern.permute.xlu0 2
        %892 = vperm.xlu0 %891, %v670
        %v893 = vpop.permute.xlu0 %892
        %895 = vset.pattern.permute.xlu0 2
        %896 = vperm.xlu0 %895, %v674
        %v897 = vpop.permute.xlu0 %896
        %899 = vset.pattern.permute.xlu0 2
        %900 = vperm.xlu0 %899, %v678
        %v901 = vpop.permute.xlu0 %900
        %903 = vset.pattern.permute.xlu0 2
        %904 = vperm.xlu0 %903, %v682
        %v905 = vpop.permute.xlu0 %904
        %907 = vset.pattern.permute.xlu0 2
        %908 = vperm.xlu0 %907, %v686
        %v909 = vpop.permute.xlu0 %908
        %911 = vset.pattern.permute.xlu0 2
        %912 = vperm.xlu0 %911, %v690
        %v913 = vpop.permute.xlu0 %912
        %915 = vset.pattern.permute.xlu0 2
        %916 = vperm.xlu0 %915, %v694
        %v917 = vpop.permute.xlu0 %916
        %919 = vset.pattern.permute.xlu0 2
        %920 = vperm.xlu0 %919, %v698
        %v921 = vpop.permute.xlu0 %920
        %v923 = vmul.f32 %v893, %v594
        %v924 = vmul.f32 %v897, %v594
        %v925 = vmul.f32 %v901, %v594
        %v926 = vmul.f32 %v905, %v594
        %v927 = vmul.f32 %v909, %v594
        %v928 = vmul.f32 %v913, %v594
        %v929 = vmul.f32 %v917, %v594
        %v930 = vmul.f32 %v921, %v594
        %v931 = vadd.f32 %v883, %v923
        %v932 = vadd.f32 %v884, %v924
        %v933 = vadd.f32 %v885, %v925
        %v934 = vadd.f32 %v886, %v926
        %v935 = vadd.f32 %v887, %v927
        %v936 = vadd.f32 %v888, %v928
        %v937 = vadd.f32 %v889, %v929
        %v938 = vadd.f32 %v890, %v930
        %v939 = vlaneseq
        %v940 = vshrl.u32 %v939, 7
        %v941 = vsub.s32 0, %v940
        %v942 = vrot.slane %v341, %v941
        %v943 = vlaneseq
        %v944 = vshrl.u32 %v943, 7
        %v945 = vsub.s32 0, %v944
        %v946 = vrot.slane %v355, %v945
        %v947 = vlaneseq
        %v948 = vshrl.u32 %v947, 7
        %v949 = vsub.s32 0, %v948
        %v950 = vrot.slane %v363, %v949
        %v951 = vlaneseq
        %v952 = vshrl.u32 %v951, 7
        %v953 = vsub.s32 0, %v952
        %v954 = vrot.slane %v365, %v953
        %v955 = vlaneseq
        %v956 = vshrl.u32 %v955, 7
        %v957 = vsub.s32 0, %v956
        %v958 = vrot.slane %v348, %v957
        %v959 = vlaneseq
        %v960 = vshrl.u32 %v959, 7
        %v961 = vsub.s32 0, %v960
        %v962 = vrot.slane %v362, %v961
        %v963 = vlaneseq
        %v964 = vshrl.u32 %v963, 7
        %v965 = vsub.s32 0, %v964
        %v966 = vrot.slane %v364, %v965
        %v967 = vlaneseq
        %v968 = vshrl.u32 %v967, 7
        %v969 = vsub.s32 0, %v968
        %v970 = vrot.slane %v366, %v969
        %971 = vset.pattern.permute.xlu0 0
        %972 = vperm.xlu0 %971, %v942
        %v973 = vpop.permute.xlu0 %972
        %975 = vset.pattern.permute.xlu0 0
        %976 = vperm.xlu0 %975, %v946
        %v977 = vpop.permute.xlu0 %976
        %979 = vset.pattern.permute.xlu0 0
        %980 = vperm.xlu0 %979, %v950
        %v981 = vpop.permute.xlu0 %980
        %983 = vset.pattern.permute.xlu0 0
        %984 = vperm.xlu0 %983, %v954
        %v985 = vpop.permute.xlu0 %984
        %987 = vset.pattern.permute.xlu0 0
        %988 = vperm.xlu0 %987, %v958
        %v989 = vpop.permute.xlu0 %988
        %991 = vset.pattern.permute.xlu0 0
        %992 = vperm.xlu0 %991, %v962
        %v993 = vpop.permute.xlu0 %992
        %995 = vset.pattern.permute.xlu0 0
        %996 = vperm.xlu0 %995, %v966
        %v997 = vpop.permute.xlu0 %996
        %999 = vset.pattern.permute.xlu0 0
        %1000 = vperm.xlu0 %999, %v970
        %v1001 = vpop.permute.xlu0 %1000
        %v1003 = vadd.f32 %v931, %v973
        %v1004 = vadd.f32 %v932, %v977
        %v1005 = vadd.f32 %v933, %v981
        %v1006 = vadd.f32 %v934, %v985
        %v1007 = vadd.f32 %v935, %v989
        %v1008 = vadd.f32 %v936, %v993
        %v1009 = vadd.f32 %v937, %v997
        %v1010 = vadd.f32 %v938, %v1001
        %v1011 = vmax.f32 %v1003, 0.2
        %v1012 = vmax.f32 %v1004, 0.2
        %v1013 = vmax.f32 %v1005, 0.2
        %v1014 = vmax.f32 %v1006, 0.2
        %v1015 = vmax.f32 %v1007, 0.2
        %v1016 = vmax.f32 %v1008, 0.2
        %v1017 = vmax.f32 %v1009, 0.2
        %v1018 = vmax.f32 %v1010, 0.2
        %v1019 = vmin.f32 %v1011, 0.8
        %v1020 = vmin.f32 %v1012, 0.8
        %v1021 = vmin.f32 %v1013, 0.8
        %v1022 = vmin.f32 %v1014, 0.8
        %v1023 = vmin.f32 %v1015, 0.8
        %v1024 = vmin.f32 %v1016, 0.8
        %v1025 = vmin.f32 %v1017, 0.8
        %v1026 = vmin.f32 %v1018, 0.8
        %1035 = vrot.lane.b32.xlu0 %v1019, 1
        %v1036 = vpop.permute.xlu0 %1035
        %1037 = vrot.lane.b32.xlu0 %v1020, 1
        %v1038 = vpop.permute.xlu0 %1037
        %1039 = vrot.lane.b32.xlu0 %v1021, 1
        %v1040 = vpop.permute.xlu0 %1039
        %1041 = vrot.lane.b32.xlu0 %v1022, 1
        %v1042 = vpop.permute.xlu0 %1041
        %1043 = vrot.lane.b32.xlu0 %v1023, 1
        %v1044 = vpop.permute.xlu0 %1043
        %1045 = vrot.lane.b32.xlu0 %v1024, 1
        %v1046 = vpop.permute.xlu0 %1045
        %1047 = vrot.lane.b32.xlu0 %v1025, 1
        %v1048 = vpop.permute.xlu0 %1047
        %1049 = vrot.lane.b32.xlu0 %v1026, 1
        %v1050 = vpop.permute.xlu0 %1049
        %vm1059 = vcmask 138248
        %1060 = vst.msk [vmem:[%s311 + $0x1] sm:$0xff] %vm1059, %v1036
        %1061 = vst.msk [vmem:[%s311 + $0x19] sm:$0xff] %vm1059, %v1038
        %1062 = vst.msk [vmem:[%s311 + $0x31] sm:$0xff] %vm1059, %v1040
        %1063 = vst.msk [vmem:[%s311 + $0x49] sm:$0xff] %vm1059, %v1042
        %1064 = vst.msk [vmem:[%s311 + $0x61] sm:$0xff] %vm1059, %v1044
        %1065 = vst.msk [vmem:[%s311 + $0x79] sm:$0xff] %vm1059, %v1046
        %1066 = vst.msk [vmem:[%s311 + $0x91] sm:$0xff] %vm1059, %v1048
        %1067 = vst.msk [vmem:[%s311 + $0xa9] sm:$0xff] %vm1059, %v1050
        %v1068 = vld [vmem:[%s264 + $0x8] sm:$0xff]
        %v1069 = vld [vmem:[%s264 + $0x18] sm:$0xff]
        %v1070 = vld [vmem:[%s264 + $0x28] sm:$0xff]
        %v1071 = vld [vmem:[%s273 + $0x8] sm:$0xff]
        %v1072 = vld [vmem:[%s273 + $0x18] sm:$0xff]
        %v1073 = vld [vmem:[%s273 + $0x28] sm:$0xff]
        %v1074 = vmul.f32 %v629, %v1068
        %v1075 = vmul.f32 %v633, %v1068
        %v1076 = vmul.f32 %v637, %v1068
        %v1077 = vmul.f32 %v641, %v1068
        %v1078 = vmul.f32 %v645, %v1068
        %v1079 = vmul.f32 %v649, %v1068
        %v1080 = vmul.f32 %v653, %v1068
        %v1081 = vmul.f32 %v657, %v1068
        %v1082 = vmul.f32 %v701, %v1071
        %v1083 = vmul.f32 %v705, %v1071
        %v1084 = vmul.f32 %v709, %v1071
        %v1085 = vmul.f32 %v713, %v1071
        %v1086 = vmul.f32 %v717, %v1071
        %v1087 = vmul.f32 %v721, %v1071
        %v1088 = vmul.f32 %v725, %v1071
        %v1089 = vmul.f32 %v729, %v1071
        %v1090 = vadd.f32 %v1074, %v1082
        %v1091 = vadd.f32 %v1075, %v1083
        %v1092 = vadd.f32 %v1076, %v1084
        %v1093 = vadd.f32 %v1077, %v1085
        %v1094 = vadd.f32 %v1078, %v1086
        %v1095 = vadd.f32 %v1079, %v1087
        %v1096 = vadd.f32 %v1080, %v1088
        %v1097 = vadd.f32 %v1081, %v1089
        %v1098 = vmul.f32 %v749, %v1069
        %v1099 = vmul.f32 %v753, %v1069
        %v1100 = vmul.f32 %v757, %v1069
        %v1101 = vmul.f32 %v761, %v1069
        %v1102 = vmul.f32 %v765, %v1069
        %v1103 = vmul.f32 %v769, %v1069
        %v1104 = vmul.f32 %v773, %v1069
        %v1105 = vmul.f32 %v777, %v1069
        %v1106 = vadd.f32 %v1090, %v1098
        %v1107 = vadd.f32 %v1091, %v1099
        %v1108 = vadd.f32 %v1092, %v1100
        %v1109 = vadd.f32 %v1093, %v1101
        %v1110 = vadd.f32 %v1094, %v1102
        %v1111 = vadd.f32 %v1095, %v1103
        %v1112 = vadd.f32 %v1096, %v1104
        %v1113 = vadd.f32 %v1097, %v1105
        %v1114 = vmul.f32 %v797, %v1072
        %v1115 = vmul.f32 %v801, %v1072
        %v1116 = vmul.f32 %v805, %v1072
        %v1117 = vmul.f32 %v809, %v1072
        %v1118 = vmul.f32 %v813, %v1072
        %v1119 = vmul.f32 %v817, %v1072
        %v1120 = vmul.f32 %v821, %v1072
        %v1121 = vmul.f32 %v825, %v1072
        %v1122 = vadd.f32 %v1106, %v1114
        %v1123 = vadd.f32 %v1107, %v1115
        %v1124 = vadd.f32 %v1108, %v1116
        %v1125 = vadd.f32 %v1109, %v1117
        %v1126 = vadd.f32 %v1110, %v1118
        %v1127 = vadd.f32 %v1111, %v1119
        %v1128 = vadd.f32 %v1112, %v1120
        %v1129 = vadd.f32 %v1113, %v1121
        %v1130 = vmul.f32 %v845, %v1070
        %v1131 = vmul.f32 %v849, %v1070
        %v1132 = vmul.f32 %v853, %v1070
        %v1133 = vmul.f32 %v857, %v1070
        %v1134 = vmul.f32 %v861, %v1070
        %v1135 = vmul.f32 %v865, %v1070
        %v1136 = vmul.f32 %v869, %v1070
        %v1137 = vmul.f32 %v873, %v1070
        %v1138 = vadd.f32 %v1122, %v1130
        %v1139 = vadd.f32 %v1123, %v1131
        %v1140 = vadd.f32 %v1124, %v1132
        %v1141 = vadd.f32 %v1125, %v1133
        %v1142 = vadd.f32 %v1126, %v1134
        %v1143 = vadd.f32 %v1127, %v1135
        %v1144 = vadd.f32 %v1128, %v1136
        %v1145 = vadd.f32 %v1129, %v1137
        %v1146 = vmul.f32 %v893, %v1073
        %v1147 = vmul.f32 %v897, %v1073
        %v1148 = vmul.f32 %v901, %v1073
        %v1149 = vmul.f32 %v905, %v1073
        %v1150 = vmul.f32 %v909, %v1073
        %v1151 = vmul.f32 %v913, %v1073
        %v1152 = vmul.f32 %v917, %v1073
        %v1153 = vmul.f32 %v921, %v1073
        %v1154 = vadd.f32 %v1138, %v1146
        %v1155 = vadd.f32 %v1139, %v1147
        %v1156 = vadd.f32 %v1140, %v1148
        %v1157 = vadd.f32 %v1141, %v1149
        %v1158 = vadd.f32 %v1142, %v1150
        %v1159 = vadd.f32 %v1143, %v1151
        %v1160 = vadd.f32 %v1144, %v1152
        %v1161 = vadd.f32 %v1145, %v1153
        %v1162 = vadd.f32 %v1154, %v973
        %v1163 = vadd.f32 %v1155, %v977
        %v1164 = vadd.f32 %v1156, %v981
        %v1165 = vadd.f32 %v1157, %v985
        %v1166 = vadd.f32 %v1158, %v989
        %v1167 = vadd.f32 %v1159, %v993
        %v1168 = vadd.f32 %v1160, %v997
        %v1169 = vadd.f32 %v1161, %v1001
        %v1170 = vmax.f32 %v1162, 0.2
        %v1171 = vmax.f32 %v1163, 0.2
        %v1172 = vmax.f32 %v1164, 0.2
        %v1173 = vmax.f32 %v1165, 0.2
        %v1174 = vmax.f32 %v1166, 0.2
        %v1175 = vmax.f32 %v1167, 0.2
        %v1176 = vmax.f32 %v1168, 0.2
        %v1177 = vmax.f32 %v1169, 0.2
        %v1178 = vmin.f32 %v1170, 0.8
        %v1179 = vmin.f32 %v1171, 0.8
        %v1180 = vmin.f32 %v1172, 0.8
        %v1181 = vmin.f32 %v1173, 0.8
        %v1182 = vmin.f32 %v1174, 0.8
        %v1183 = vmin.f32 %v1175, 0.8
        %v1184 = vmin.f32 %v1176, 0.8
        %v1185 = vmin.f32 %v1177, 0.8
        %1194 = vrot.lane.b32.xlu0 %v1178, 1
        %v1195 = vpop.permute.xlu0 %1194
        %1196 = vrot.lane.b32.xlu0 %v1179, 1
        %v1197 = vpop.permute.xlu0 %1196
        %1198 = vrot.lane.b32.xlu0 %v1180, 1
        %v1199 = vpop.permute.xlu0 %1198
        %1200 = vrot.lane.b32.xlu0 %v1181, 1
        %v1201 = vpop.permute.xlu0 %1200
        %1202 = vrot.lane.b32.xlu0 %v1182, 1
        %v1203 = vpop.permute.xlu0 %1202
        %1204 = vrot.lane.b32.xlu0 %v1183, 1
        %v1205 = vpop.permute.xlu0 %1204
        %1206 = vrot.lane.b32.xlu0 %v1184, 1
        %v1207 = vpop.permute.xlu0 %1206
        %1208 = vrot.lane.b32.xlu0 %v1185, 1
        %v1209 = vpop.permute.xlu0 %1208
        %1218 = vst.msk [vmem:[%s311 + $0x9] sm:$0xff] %vm1059, %v1195
        %1219 = vst.msk [vmem:[%s311 + $0x21] sm:$0xff] %vm1059, %v1197
        %1220 = vst.msk [vmem:[%s311 + $0x39] sm:$0xff] %vm1059, %v1199
        %1221 = vst.msk [vmem:[%s311 + $0x51] sm:$0xff] %vm1059, %v1201
        %1222 = vst.msk [vmem:[%s311 + $0x69] sm:$0xff] %vm1059, %v1203
        %1223 = vst.msk [vmem:[%s311 + $0x81] sm:$0xff] %vm1059, %v1205
        %1224 = vst.msk [vmem:[%s311 + $0x99] sm:$0xff] %vm1059, %v1207
        %1225 = vst.msk [vmem:[%s311 + $0xb1] sm:$0xff] %vm1059, %v1209
        %p1226 = scmp.lt.s32.totalorder %s23, 2
        %s1227 = scalar_select %p1226, %s23, 2
        %s1228 = smul.addr %s1227, 24
        %s1229 = smul.addr %s1228, 8
        %s1230 = scalar_lea.vmem %s6, %s1229
        // Predicated region
        $region53: #{fused_model_forward.1} parent=43 // pred_check
          %p1231 = pneg %p177
        $region54: #{fused_model_forward.1} parent=43 // pred_check_branch
          %1233 = sbr.rel (%p1231) target = $region56
        $region55: #{fused_model_forward.1} parent=43 // pred_region
          _
        $region56: #{fused_model_forward.1} parent=43 // pred_fallthru
          _
      $region44: #{fused_model_forward.1} parent=5 // pred_fallthru
        _
      %p1234 = scmp.le.s32.totalorder 2, %s18
      // Predicated region
      $region57: #{fused_model_forward.1} parent=5 // pred_check
        %p1235 = pneg %p1234
      $region58: #{fused_model_forward.1} parent=5 // pred_check_branch
        %1237 = sbr.rel (%p1235) target = $region60
      $region59: #{fused_model_forward.1} parent=5 // pred_region
        %s1238 = ssub.s32 %s18, 2
        // Predicated region
        $region61: #{fused_model_forward.1} parent=59 // pred_check
          %p1239 = pneg %p183
        $region62: #{fused_model_forward.1} parent=59 // pred_check_branch
          %1241 = sbr.rel (%p1239) target = $region64
        $region63: #{fused_model_forward.1} parent=59 // pred_region
          %p1242 = scmp.lt.s32.totalorder %s24, 2
          %s1243 = scalar_select %p1242, %s24, 2
          %s1244 = smul.addr %s1243, 24
          %s1245 = smul.addr %s1244, 8
          %s1246 = scalar_lea.vmem %s6, %s1245
        $region64: #{fused_model_forward.1} parent=59 // pred_fallthru
          _
      $region60: #{fused_model_forward.1} parent=5 // pred_fallthru
        _
    $region6: #{fused_model_forward.1} parent=1 // loop_footer
      %s22 = sadd.s32 1, %s18
    $region7: #{fused_model_forward.1} parent=1 // loop_footer_branch
      %17 = sbr.rel target = $region3
    $region8: #{fused_model_forward.1} parent=1 // loop_exit
      _
    %1247 = vsyncpa [#allocation3], 1
    %s1248 = scalar_lea.sflag [#allocation3], 1
    %1249 = vsyncpa %s1248, 1
    %1250 = vsyncpa [#allocation5], 1
    %s1251 = scalar_lea.sflag [#allocation5], 1
    %1252 = vsyncpa %s1251, 1

</llo_original>
